<compile_context>
chip_gen: v5e
topology: v5e:2x2
jax: 0.10.0
libtpu: 0.0.40
codegen_flags: <defaults>
</compile_context>

<pallas_src>
import math

import jax
import jax.numpy as jnp
from jax.experimental import pallas as pl
from jax.experimental.pallas import tpu as pltpu


# ----------------------------------------------------------------------------
# Pallas kernel 1: 3x3 convolution (stride 1, pad 1), NHWC, im2col-in-K on MXU
# ----------------------------------------------------------------------------
def conv3x3_pallas(x_nhwc, w_hwio, bias):
    B, H, W, Cin = x_nhwc.shape
    Cout = w_hwio.shape[-1]
    # bf16 at the kernel boundary halves the DMA bytes of the padded copy and
    # feeds the MXU its native dtype; accumulation stays f32.
    # TODO(synk): the halo pad could be fused into the kernel (in-kernel masking)
    # to remove this extra HBM pass on large feature maps.
    xp = jnp.pad(x_nhwc.astype(jnp.bfloat16), ((0, 0), (1, 1), (1, 1), (0, 0)))
    # weight rows ordered as (dy*3 + dx)*Cin + c -> matches the tap concat below
    w = w_hwio.reshape(9 * Cin, Cout).astype(jnp.bfloat16)
    b = bias.reshape(1, Cout).astype(jnp.float32)

    def kernel(xp_ref, w_ref, b_ref, o_ref):
        xf = xp_ref[...].astype(jnp.float32)[0]              # (H+2, W+2, Cin)
        taps = []
        for dy in range(3):
            for dx in range(3):
                taps.append(xf[dy:dy + H, dx:dx + W, :])     # (H, W, Cin)
        patches = jnp.concatenate(taps, axis=-1)             # (H, W, 9*Cin)
        patches = patches.reshape(H * W, 9 * Cin).astype(jnp.bfloat16)
        acc = jnp.dot(patches, w_ref[...],                   # single MXU matmul
                      preferred_element_type=jnp.float32)    # (H*W, Cout) f32
        o_ref[...] = (acc + b_ref[...]).reshape(1, H * W, Cout)

    out = pl.pallas_call(
        kernel,
        out_shape=jax.ShapeDtypeStruct((B, H * W, Cout), jnp.float32),
        grid=(B,),
        in_specs=[
            pl.BlockSpec((1, H + 2, W + 2, Cin), lambda i: (i, 0, 0, 0)),
            pl.BlockSpec((9 * Cin, Cout), lambda i: (0, 0)),
            pl.BlockSpec((1, Cout), lambda i: (0, 0)),
        ],
        out_specs=pl.BlockSpec((1, H * W, Cout), lambda i: (i, 0, 0)),
        compiler_params=pltpu.CompilerParams(
            dimension_semantics=("parallel",),          # >=2 blocks for v7x 2-TC
            vmem_limit_bytes=32 * 1024 * 1024),
    )(xp, w, b)
    return out.reshape(B, H, W, Cout)


# ----------------------------------------------------------------------------
# Pallas kernel 2: fused reconstruct_feature (Gaussian smoothing + all glue)
# ----------------------------------------------------------------------------
def reconstruct_feature_pallas(feature, mask, kernel_size, sigma):
    # feature: (B,H,W,C) already mask-normalized & masked; mask: (B,H,W,1) binary
    if kernel_size < 3:
        return feature
    B, H, W, C = feature.shape
    p = (kernel_size - 1) // 2
    mean = (kernel_size - 1) / 2.0
    var = float(sigma) ** 2.0
    gw = []
    for dy in range(kernel_size):
        for dx in range(kernel_size):
            gw.append(
                (1.0 / (2.0 * math.pi * var))
                * math.exp(-((dx - mean) ** 2 + (dy - mean) ** 2) / (2.0 * var))
            )
    s = sum(gw)
    gw = [g / s for g in gw]  # baked in as trace-time constants

    fpad = jnp.pad(feature, ((0, 0), (p, p), (p, p), (0, 0)))
    mpad = jnp.pad(mask, ((0, 0), (p, p), (p, p), (0, 0)))

    def kernel(fp_ref, mp_ref, o_ref):
        fp = fp_ref[...]                                  # (1, H+2p, W+2p, C)
        mp = mp_ref[...]                                  # (1, H+2p, W+2p, 1)
        fm = fp * mp                                      # feature * mask
        acc_f = jnp.zeros((1, H, W, C), jnp.float32)
        acc_m = jnp.zeros((1, H, W, 1), jnp.float32)
        for dy in range(kernel_size):
            for dx in range(kernel_size):
                g = gw[dy * kernel_size + dx]
                acc_f = acc_f + g * fm[:, dy:dy + H, dx:dx + W, :]
                acc_m = acc_m + g * mp[:, dy:dy + H, dx:dx + W, :]
        inv = pl.reciprocal(acc_m + 1e-6, approx=True)    # EUP slot, ~free
        f_inter = acc_f * inv
        m_inter = (acc_m > 0).astype(jnp.float32)
        f_inter = f_inter * m_inter
        f_in = fm[:, p:p + H, p:p + W, :]
        m_in = mp[:, p:p + H, p:p + W, :]
        o_ref[...] = f_in + (1.0 - m_in) * f_inter

    return pl.pallas_call(
        kernel,
        out_shape=jax.ShapeDtypeStruct((B, H, W, C), jnp.float32),
        grid=(B,),
        in_specs=[
            pl.BlockSpec((1, H + 2 * p, W + 2 * p, C), lambda i: (i, 0, 0, 0)),
            pl.BlockSpec((1, H + 2 * p, W + 2 * p, 1), lambda i: (i, 0, 0, 0)),
        ],
        out_specs=pl.BlockSpec((1, H, W, C), lambda i: (i, 0, 0, 0)),
        compiler_params=pltpu.CompilerParams(
            dimension_semantics=("parallel",),
            vmem_limit_bytes=32 * 1024 * 1024),
    )(fpad, mpad)


# ----------------------------------------------------------------------------
# Pallas kernel 3: fused LayerNorm(C) + Linear(C -> 1), single block over B*N
# ----------------------------------------------------------------------------
def norm_conf_pallas(x, gamma, beta, conf_w, conf_b):
    B, N, C = x.shape
    x2 = x.reshape(B * N, C)   # fold batch into rows: one block, full sublane fill

    def kernel(x_ref, g_ref, b_ref, w_ref, wb_ref, conf_ref):
        xv = x_ref[...].astype(jnp.float32)                       # (B*N, C)
        mu = jnp.mean(xv, axis=-1, keepdims=True)
        var = jnp.mean(jnp.square(xv - mu), axis=-1, keepdims=True)
        xn = (xv - mu) * jax.lax.rsqrt(var + 1e-5)
        xn = xn * g_ref[...] + b_ref[...]
        conf_ref[...] = jnp.sum(xn * w_ref[...], axis=-1, keepdims=True) + wb_ref[...]

    out = pl.pallas_call(
        kernel,
        out_shape=jax.ShapeDtypeStruct((B * N, 1), jnp.float32),
        grid=(1,),
        in_specs=[
            pl.BlockSpec((B * N, C), lambda i: (0, 0)),
            pl.BlockSpec((1, C), lambda i: (0, 0)),
            pl.BlockSpec((1, C), lambda i: (0, 0)),
            pl.BlockSpec((1, C), lambda i: (0, 0)),
            pl.BlockSpec((1, 1), lambda i: (0, 0)),
        ],
        out_specs=pl.BlockSpec((B * N, 1), lambda i: (0, 0)),
        compiler_params=pltpu.CompilerParams(dimension_semantics=("arbitrary",)),
    )(
        x2,
        gamma.reshape(1, C),
        beta.reshape(1, C),
        conf_w.reshape(1, C),
        conf_b.reshape(1, 1),
    )
    return out.reshape(B, N, 1)


# ----------------------------------------------------------------------------
# JAX glue: token2map / map2token / gumbel top-k
# ----------------------------------------------------------------------------
def token2map_jax(x, loc, H, W, kernel_size, sigma):
    # x: (B, N, C), loc: (B, N, 2) in [0,1];  returns NHWC feature map (B,H,W,C)
    B, N, C = x.shape
    loc = jnp.clip(loc, 0.0, 1.0)
    scale = jnp.array([W - 1, H - 1], dtype=loc.dtype)
    loc_px = jnp.round(loc * scale).astype(jnp.int32)
    idx = loc_px[..., 0] + loc_px[..., 1] * W                      # (B, N)
    src = jnp.concatenate([x, jnp.ones((B, N, 1), x.dtype)], axis=-1)

    def scatter_one(idx_b, src_b):
        return jnp.zeros((H * W, C + 1), x.dtype).at[idx_b].add(src_b)

    out = jax.vmap(scatter_one)(idx, src)                          # (B, H*W, C+1)
    out = out.reshape(B, H, W, C + 1)
    feature, mask = out[..., :C], out[..., C:]
    feature = feature / (mask + 1e-6)
    mask = (mask > 0).astype(x.dtype)
    feature = feature * mask
    feature = reconstruct_feature_pallas(feature, mask, kernel_size, sigma)
    return feature


def map2token_jax(feat_nhwc, loc):
    # grid_sample(bilinear, align_corners=False, padding_mode='zeros')
    B, H, W, C = feat_nhwc.shape
    gx = loc[..., 0] * 2.0 - 1.0
    gy = loc[..., 1] * 2.0 - 1.0
    ix = ((gx + 1.0) * W - 1.0) / 2.0
    iy = ((gy + 1.0) * H - 1.0) / 2.0
    x0 = jnp.floor(ix)
    y0 = jnp.floor(iy)
    x1, y1 = x0 + 1.0, y0 + 1.0
    wx1, wy1 = ix - x0, iy - y0
    wx0, wy0 = 1.0 - wx1, 1.0 - wy1

    def gather(feat_b, yy, xx):
        valid = (xx >= 0) & (xx <= W - 1) & (yy >= 0) & (yy <= H - 1)
        xi = jnp.clip(xx, 0, W - 1).astype(jnp.int32)
        yi = jnp.clip(yy, 0, H - 1).astype(jnp.int32)
        vals = feat_b[yi, xi]                                      # (N, C)
        return vals * valid[:, None].astype(feat_b.dtype)

    def per_batch(feat_b, y0b, x0b, y1b, x1b, w00, w01, w10, w11):
        v00 = gather(feat_b, y0b, x0b)
        v01 = gather(feat_b, y0b, x1b)
        v10 = gather(feat_b, y1b, x0b)
        v11 = gather(feat_b, y1b, x1b)
        return (v00 * w00[:, None] + v01 * w01[:, None]
                + v10 * w10[:, None] + v11 * w11[:, None])

    return jax.vmap(per_batch)(feat_nhwc, y0, x0, y1, x1,
                               wy0 * wx0, wy0 * wx1, wy1 * wx0, wy1 * wx1)


def gumble_top_k_jax(key, x, k, T=1.0, p_value=1e-6):
    # x: (B, Na, 1); top-k along dim=1   (exact reference formula)
    noise = jax.random.uniform(key, x.shape, dtype=x.dtype)
    noise = -jnp.log(noise + p_value)
    noise = -jnp.log(noise + p_value)
    y = (x / T + noise)[..., 0]                                    # (B, Na)
    _, idx = jax.lax.top_k(y, k)
    return idx                                                     # (B, k)


# ----------------------------------------------------------------------------
# DownLayer
# ----------------------------------------------------------------------------
class DownLayerPallas:
    def __init__(self, sample_ratio, embed_dim, dim_out, sr_ratio=2, key=None):
        self.sample_ratio = sample_ratio
        self.embed_dim = embed_dim
        self.dim_out = dim_out
        self.sr_ratio = sr_ratio       # stands in for down_block.attn.sr_ratio
        self.T = 1.0
        self.T_min = 1.0
        self.T_decay = 0.9998

        if key is None:
            key = jax.random.PRNGKey(42)
        k1, k2, k3, k4 = jax.random.split(key, 4)
        # Conv2d(embed_dim, dim_out, 3, 1, 1): weight in HWIO layout
        self.conv_w = 0.1 * jax.random.normal(k1, (3, 3, embed_dim, dim_out),
                                              jnp.float32)
        self.conv_b = 0.01 * jax.random.normal(k2, (dim_out,), jnp.float32)
        # LayerNorm(dim_out)
        self.ln_g = jnp.ones((dim_out,), jnp.float32)
        self.ln_b = jnp.zeros((dim_out,), jnp.float32)
        # Linear(dim_out, 1)
        self.conf_w = 0.1 * jax.random.normal(k3, (dim_out,), jnp.float32)
        self.conf_b = 0.01 * jax.random.normal(k4, (1,), jnp.float32)

    def __call__(self, x, pos, H, W, N_grid, rng_key):
        kernel_size = self.sr_ratio + 1
        fmap = token2map_jax(x, pos, H, W, kernel_size, 2)         # (B,H,W,Cin)
        fmap = conv3x3_pallas(fmap, self.conv_w, self.conv_b)      # (B,H,W,Cout)
        xt = map2token_jax(fmap, pos)                              # (B,N,Cout)

        B, N, C = xt.shape
        sample_num = max(math.ceil(N * self.sample_ratio), 0)
        x_grid, x_ada = xt[:, :N_grid], xt[:, N_grid:]
        pos_grid, pos_ada = pos[:, :N_grid], pos[:, N_grid:]

        conf = norm_conf_pallas(xt, self.ln_g, self.ln_b,
                                self.conf_w, self.conf_b)          # (B,N,1)
        conf_ada = conf[:, N_grid:]

        # NOTE: Python-side temperature state (matches the reference buffer
        # update).  Under jax.jit this would be baked in at trace time.
        T = self.T
        self.T = min(max(self.T * self.T_decay, self.T_min), 1.0)

        index_down = gumble_top_k_jax(rng_key, conf_ada, sample_num, T=T)
        idx_c = jnp.broadcast_to(index_down[..., None], (B, sample_num, C))
        idx_p = jnp.broadcast_to(index_down[..., None], (B, sample_num, 2))
        x_sel = jnp.take_along_axis(x_ada, idx_c, axis=1)
        pos_sel = jnp.take_along_axis(pos_ada, idx_p, axis=1)

        x_down = jnp.concatenate([x_grid, x_sel], axis=1)
        pos_down = jnp.concatenate([pos_grid, pos_sel], axis=1)

        # TODO(synk): self.block (external `down_block` transformer block passed
        # at construction) has no definition in the reference; identity here.
        return x_down, pos_down


# ----------------------------------------------------------------------------
if __name__ == "__main__":
    key = jax.random.PRNGKey(0)
    k_x, k_pos, k_params, k_gumbel = jax.random.split(key, 4)

    B, H, W = 2, 8, 8
    N = H * W                 # 64 tokens
    embed_dim, dim_out = 32, 32
    N_grid = 16
    sample_ratio = 0.25       # sample_num = 16

    x = jax.random.normal(k_x, (B, N, embed_dim), jnp.float32)
    pos = jax.random.uniform(k_pos, (B, N, 2), jnp.float32)

    layer = DownLayerPallas(sample_ratio, embed_dim, dim_out, sr_ratio=2,
                            key=k_params)
    x_down, pos_down = layer(x, pos, H, W, N_grid, k_gumbel)
    jax.block_until_ready((x_down, pos_down))

    assert x_down.shape == (B, N_grid + math.ceil(N * sample_ratio), dim_out)
    assert pos_down.shape == (B, N_grid + math.ceil(N * sample_ratio), 2)
    assert bool(jnp.all(jnp.isfinite(x_down)))
    print("KERNEL_OK")
</pallas_src>

<mosaic_0001>
module attributes {stable_mosaic.version = 11 : i64} {
  func.func @kernel(%arg0: i32, %arg1: memref<1x10x10x32xf32, #tpu.memory_space<vmem>>, %arg2: memref<1x10x10x1xf32, #tpu.memory_space<vmem>>, %arg3: memref<1x8x8x32xf32, #tpu.memory_space<vmem>>) attributes {dimension_semantics = [#tpu.dimension_semantics<parallel>], iteration_bounds = array<i64: 2>, scalar_prefetch = 0 : i64, scratch_operands = 0 : i64, tpu.core_type = #tpu.core_type<tc>, window_params = [{transform_indices = @transform_0, window_bounds = array<i64: 1, 10, 10, 32>}, {transform_indices = @transform_1, window_bounds = array<i64: 1, 10, 10, 1>}, {transform_indices = @transform_2, window_bounds = array<i64: 1, 8, 8, 32>}]} {
    %c0 = arith.constant 0 : index
    %c0_0 = arith.constant 0 : index
    %c0_1 = arith.constant 0 : index
    %c0_2 = arith.constant 0 : index
    %0 = vector.load %arg1[%c0, %c0_0, %c0_1, %c0_2] : memref<1x10x10x32xf32, #tpu.memory_space<vmem>>, vector<1x10x10x32xf32>
    %c0_3 = arith.constant 0 : index
    %c0_4 = arith.constant 0 : index
    %c0_5 = arith.constant 0 : index
    %c0_6 = arith.constant 0 : index
    %1 = vector.load %arg2[%c0_3, %c0_4, %c0_5, %c0_6] : memref<1x10x10x1xf32, #tpu.memory_space<vmem>>, vector<1x10x10x1xf32>
    %2 = vector.broadcast %1 : vector<1x10x10x1xf32> to vector<1x10x10x32xf32>
    %3 = arith.mulf %0, %2 : vector<1x10x10x32xf32>
    %cst = arith.constant 0.000000e+00 : f32
    %4 = vector.broadcast %cst : f32 to vector<1x8x8x32xf32>
    %cst_7 = arith.constant 0.000000e+00 : f32
    %5 = vector.broadcast %cst_7 : f32 to vector<1x8x8x1xf32>
    %6 = vector.extract_strided_slice %3 {offsets = [0, 0, 0, 0], sizes = [1, 8, 8, 32], strides = [1, 1, 1, 1]} : vector<1x10x10x32xf32> to vector<1x8x8x32xf32>
    %cst_8 = arith.constant 0.101868063 : f32
    %7 = vector.broadcast %cst_8 : f32 to vector<1x8x8x32xf32>
    %8 = arith.mulf %7, %6 : vector<1x8x8x32xf32>
    %9 = arith.addf %4, %8 : vector<1x8x8x32xf32>
    %10 = vector.extract_strided_slice %1 {offsets = [0, 0, 0, 0], sizes = [1, 8, 8, 1], strides = [1, 1, 1, 1]} : vector<1x10x10x1xf32> to vector<1x8x8x1xf32>
    %cst_9 = arith.constant 0.101868063 : f32
    %11 = vector.broadcast %cst_9 : f32 to vector<1x8x8x1xf32>
    %12 = arith.mulf %11, %10 : vector<1x8x8x1xf32>
    %13 = arith.addf %5, %12 : vector<1x8x8x1xf32>
    %14 = vector.extract_strided_slice %3 {offsets = [0, 0, 1, 0], sizes = [1, 8, 8, 32], strides = [1, 1, 1, 1]} : vector<1x10x10x32xf32> to vector<1x8x8x32xf32>
    %cst_10 = arith.constant 0.115431637 : f32
    %15 = vector.broadcast %cst_10 : f32 to vector<1x8x8x32xf32>
    %16 = arith.mulf %15, %14 : vector<1x8x8x32xf32>
    %17 = arith.addf %9, %16 : vector<1x8x8x32xf32>
    %18 = vector.extract_strided_slice %1 {offsets = [0, 0, 1, 0], sizes = [1, 8, 8, 1], strides = [1, 1, 1, 1]} : vector<1x10x10x1xf32> to vector<1x8x8x1xf32>
    %cst_11 = arith.constant 0.115431637 : f32
    %19 = vector.broadcast %cst_11 : f32 to vector<1x8x8x1xf32>
    %20 = arith.mulf %19, %18 : vector<1x8x8x1xf32>
    %21 = arith.addf %13, %20 : vector<1x8x8x1xf32>
    %22 = vector.extract_strided_slice %3 {offsets = [0, 0, 2, 0], sizes = [1, 8, 8, 32], strides = [1, 1, 1, 1]} : vector<1x10x10x32xf32> to vector<1x8x8x32xf32>
    %cst_12 = arith.constant 0.101868063 : f32
    %23 = vector.broadcast %cst_12 : f32 to vector<1x8x8x32xf32>
    %24 = arith.mulf %23, %22 : vector<1x8x8x32xf32>
    %25 = arith.addf %17, %24 : vector<1x8x8x32xf32>
    %26 = vector.extract_strided_slice %1 {offsets = [0, 0, 2, 0], sizes = [1, 8, 8, 1], strides = [1, 1, 1, 1]} : vector<1x10x10x1xf32> to vector<1x8x8x1xf32>
    %cst_13 = arith.constant 0.101868063 : f32
    %27 = vector.broadcast %cst_13 : f32 to vector<1x8x8x1xf32>
    %28 = arith.mulf %27, %26 : vector<1x8x8x1xf32>
    %29 = arith.addf %21, %28 : vector<1x8x8x1xf32>
    %30 = vector.extract_strided_slice %3 {offsets = [0, 1, 0, 0], sizes = [1, 8, 8, 32], strides = [1, 1, 1, 1]} : vector<1x10x10x32xf32> to vector<1x8x8x32xf32>
    %cst_14 = arith.constant 0.115431637 : f32
    %31 = vector.broadcast %cst_14 : f32 to vector<1x8x8x32xf32>
    %32 = arith.mulf %31, %30 : vector<1x8x8x32xf32>
    %33 = arith.addf %25, %32 : vector<1x8x8x32xf32>
    %34 = vector.extract_strided_slice %1 {offsets = [0, 1, 0, 0], sizes = [1, 8, 8, 1], strides = [1, 1, 1, 1]} : vector<1x10x10x1xf32> to vector<1x8x8x1xf32>
    %cst_15 = arith.constant 0.115431637 : f32
    %35 = vector.broadcast %cst_15 : f32 to vector<1x8x8x1xf32>
    %36 = arith.mulf %35, %34 : vector<1x8x8x1xf32>
    %37 = arith.addf %29, %36 : vector<1x8x8x1xf32>
    %38 = vector.extract_strided_slice %3 {offsets = [0, 1, 1, 0], sizes = [1, 8, 8, 32], strides = [1, 1, 1, 1]} : vector<1x10x10x32xf32> to vector<1x8x8x32xf32>
    %cst_16 = arith.constant 0.130801186 : f32
    %39 = vector.broadcast %cst_16 : f32 to vector<1x8x8x32xf32>
    %40 = arith.mulf %39, %38 : vector<1x8x8x32xf32>
    %41 = arith.addf %33, %40 : vector<1x8x8x32xf32>
    %42 = vector.extract_strided_slice %1 {offsets = [0, 1, 1, 0], sizes = [1, 8, 8, 1], strides = [1, 1, 1, 1]} : vector<1x10x10x1xf32> to vector<1x8x8x1xf32>
    %cst_17 = arith.constant 0.130801186 : f32
    %43 = vector.broadcast %cst_17 : f32 to vector<1x8x8x1xf32>
    %44 = arith.mulf %43, %42 : vector<1x8x8x1xf32>
    %45 = arith.addf %37, %44 : vector<1x8x8x1xf32>
    %46 = vector.extract_strided_slice %3 {offsets = [0, 1, 2, 0], sizes = [1, 8, 8, 32], strides = [1, 1, 1, 1]} : vector<1x10x10x32xf32> to vector<1x8x8x32xf32>
    %cst_18 = arith.constant 0.115431637 : f32
    %47 = vector.broadcast %cst_18 : f32 to vector<1x8x8x32xf32>
    %48 = arith.mulf %47, %46 : vector<1x8x8x32xf32>
    %49 = arith.addf %41, %48 : vector<1x8x8x32xf32>
    %50 = vector.extract_strided_slice %1 {offsets = [0, 1, 2, 0], sizes = [1, 8, 8, 1], strides = [1, 1, 1, 1]} : vector<1x10x10x1xf32> to vector<1x8x8x1xf32>
    %cst_19 = arith.constant 0.115431637 : f32
    %51 = vector.broadcast %cst_19 : f32 to vector<1x8x8x1xf32>
    %52 = arith.mulf %51, %50 : vector<1x8x8x1xf32>
    %53 = arith.addf %45, %52 : vector<1x8x8x1xf32>
    %54 = vector.extract_strided_slice %3 {offsets = [0, 2, 0, 0], sizes = [1, 8, 8, 32], strides = [1, 1, 1, 1]} : vector<1x10x10x32xf32> to vector<1x8x8x32xf32>
    %cst_20 = arith.constant 0.101868063 : f32
    %55 = vector.broadcast %cst_20 : f32 to vector<1x8x8x32xf32>
    %56 = arith.mulf %55, %54 : vector<1x8x8x32xf32>
    %57 = arith.addf %49, %56 : vector<1x8x8x32xf32>
    %58 = vector.extract_strided_slice %1 {offsets = [0, 2, 0, 0], sizes = [1, 8, 8, 1], strides = [1, 1, 1, 1]} : vector<1x10x10x1xf32> to vector<1x8x8x1xf32>
    %cst_21 = arith.constant 0.101868063 : f32
    %59 = vector.broadcast %cst_21 : f32 to vector<1x8x8x1xf32>
    %60 = arith.mulf %59, %58 : vector<1x8x8x1xf32>
    %61 = arith.addf %53, %60 : vector<1x8x8x1xf32>
    %62 = vector.extract_strided_slice %3 {offsets = [0, 2, 1, 0], sizes = [1, 8, 8, 32], strides = [1, 1, 1, 1]} : vector<1x10x10x32xf32> to vector<1x8x8x32xf32>
    %cst_22 = arith.constant 0.115431637 : f32
    %63 = vector.broadcast %cst_22 : f32 to vector<1x8x8x32xf32>
    %64 = arith.mulf %63, %62 : vector<1x8x8x32xf32>
    %65 = arith.addf %57, %64 : vector<1x8x8x32xf32>
    %66 = vector.extract_strided_slice %1 {offsets = [0, 2, 1, 0], sizes = [1, 8, 8, 1], strides = [1, 1, 1, 1]} : vector<1x10x10x1xf32> to vector<1x8x8x1xf32>
    %cst_23 = arith.constant 0.115431637 : f32
    %67 = vector.broadcast %cst_23 : f32 to vector<1x8x8x1xf32>
    %68 = arith.mulf %67, %66 : vector<1x8x8x1xf32>
    %69 = arith.addf %61, %68 : vector<1x8x8x1xf32>
    %70 = vector.extract_strided_slice %3 {offsets = [0, 2, 2, 0], sizes = [1, 8, 8, 32], strides = [1, 1, 1, 1]} : vector<1x10x10x32xf32> to vector<1x8x8x32xf32>
    %cst_24 = arith.constant 0.101868063 : f32
    %71 = vector.broadcast %cst_24 : f32 to vector<1x8x8x32xf32>
    %72 = arith.mulf %71, %70 : vector<1x8x8x32xf32>
    %73 = arith.addf %65, %72 : vector<1x8x8x32xf32>
    %74 = vector.extract_strided_slice %1 {offsets = [0, 2, 2, 0], sizes = [1, 8, 8, 1], strides = [1, 1, 1, 1]} : vector<1x10x10x1xf32> to vector<1x8x8x1xf32>
    %cst_25 = arith.constant 0.101868063 : f32
    %75 = vector.broadcast %cst_25 : f32 to vector<1x8x8x1xf32>
    %76 = arith.mulf %75, %74 : vector<1x8x8x1xf32>
    %77 = arith.addf %69, %76 : vector<1x8x8x1xf32>
    %cst_26 = arith.constant 9.99999997E-7 : f32
    %78 = vector.broadcast %cst_26 : f32 to vector<1x8x8x1xf32>
    %79 = arith.addf %77, %78 : vector<1x8x8x1xf32>
    %80 = tpu.reciprocal %79 {approx = true} : vector<1x8x8x1xf32> -> vector<1x8x8x1xf32>
    %81 = vector.broadcast %80 : vector<1x8x8x1xf32> to vector<1x8x8x32xf32>
    %82 = arith.mulf %73, %81 : vector<1x8x8x32xf32>
    %cst_27 = arith.constant 0.000000e+00 : f32
    %83 = vector.broadcast %cst_27 : f32 to vector<1x8x8x1xf32>
    %84 = arith.cmpf ogt, %77, %83 : vector<1x8x8x1xf32>
    %85 = arith.extui %84 : vector<1x8x8x1xi1> to vector<1x8x8x1xi32>
    %86 = arith.sitofp %85 : vector<1x8x8x1xi32> to vector<1x8x8x1xf32>
    %87 = vector.broadcast %86 : vector<1x8x8x1xf32> to vector<1x8x8x32xf32>
    %88 = arith.mulf %82, %87 : vector<1x8x8x32xf32>
    %89 = vector.extract_strided_slice %3 {offsets = [0, 1, 1, 0], sizes = [1, 8, 8, 32], strides = [1, 1, 1, 1]} : vector<1x10x10x32xf32> to vector<1x8x8x32xf32>
    %90 = vector.extract_strided_slice %1 {offsets = [0, 1, 1, 0], sizes = [1, 8, 8, 1], strides = [1, 1, 1, 1]} : vector<1x10x10x1xf32> to vector<1x8x8x1xf32>
    %cst_28 = arith.constant 1.000000e+00 : f32
    %91 = vector.broadcast %cst_28 : f32 to vector<1x8x8x1xf32>
    %92 = arith.subf %91, %90 : vector<1x8x8x1xf32>
    %93 = vector.broadcast %92 : vector<1x8x8x1xf32> to vector<1x8x8x32xf32>
    %94 = arith.mulf %93, %88 : vector<1x8x8x32xf32>
    %95 = arith.addf %89, %94 : vector<1x8x8x32xf32>
    %c0_29 = arith.constant 0 : index
    %c0_30 = arith.constant 0 : index
    %c0_31 = arith.constant 0 : index
    %c0_32 = arith.constant 0 : index
    %96 = vector.load %arg3[%c0_29, %c0_30, %c0_31, %c0_32] : memref<1x8x8x32xf32, #tpu.memory_space<vmem>>, vector<1x8x8x32xf32>
    tpu.vector_store %arg3[%c0_29, %c0_30, %c0_31, %c0_32], %95 {strides = array<i32>} : memref<1x8x8x32xf32, #tpu.memory_space<vmem>>, vector<1x8x8x32xf32>,
    return
  }
  func.func @transform_0(%arg0: i32) -> (i32, i32, i32, i32) {
    %c0_i32 = arith.constant 0 : i32
    %c0_i32_0 = arith.constant 0 : i32
    %c0_i32_1 = arith.constant 0 : i32
    %c0_i32_2 = arith.constant 0 : i32
    return %arg0, %c0_i32, %c0_i32_0, %c0_i32_1 : i32, i32, i32, i32
  }
  func.func @transform_1(%arg0: i32) -> (i32, i32, i32, i32) {
    %c0_i32 = arith.constant 0 : i32
    %c0_i32_0 = arith.constant 0 : i32
    %c0_i32_1 = arith.constant 0 : i32
    %c0_i32_2 = arith.constant 0 : i32
    return %arg0, %c0_i32, %c0_i32_0, %c0_i32_1 : i32, i32, i32, i32
  }
  func.func @transform_2(%arg0: i32) -> (i32, i32, i32, i32) {
    %c0_i32 = arith.constant 0 : i32
    %c0_i32_0 = arith.constant 0 : i32
    %c0_i32_1 = arith.constant 0 : i32
    %c0_i32_2 = arith.constant 0 : i32
    return %arg0, %c0_i32, %c0_i32_0, %c0_i32_1 : i32, i32, i32, i32
  }
}

</mosaic_0001>

<llo_original>
// kernel: tpu_custom_call.1
$region0: #{tpu_custom_call.1}
  #allocation0 [shape = 'u32[]', space=smem, size = 0x4, offset = 0x4, fixed_abs, tag = 'smem constant byte address 0x4 - core index']
  #allocation1 [shape = 'u32[72,128]{1,0:T(1,128)}', space=vmem, size = 0x9000, scoped, tag = 'internal scratch']
  %s0 = inlined_call_operand.vmem [shape: f32[2,10,10,32], index: 0, kind: input, shape index: {}]
  %s1 = inlined_call_operand.vmem [shape: f32[2,10,10,1], index: 1, kind: input, shape index: {}]
  %s2 = inlined_call_operand.hbm [shape: f32[2,8,8,32], index: 2, kind: output, shape index: {}]
  %s3 = sld [smem:[#allocation0]]
  $region41: #{tpu_custom_call.1} parent=0
    _
  %s5 = ssub.s32 1, %s3
  %s6 = scalar_select 0, %s5, %s3
  $region1: #{tpu_custom_call.1} parent=0
    #allocation2 [shape = 'u8[65536]{0}', space=vmem, size = 0x10000, scoped, tag = 'output window, operand 0']
    #allocation3 [shape = 's32[2]{0}', space=sflag, size = 0x8, scoped, tag = 'scoped memory for tpu_custom_call.1']
    %7 = vsyncpa [#allocation3], 0
    %s8 = scalar_lea.sflag [#allocation3], 1
    %9 = vsyncpa %s8, 0
    loop: start=0, step=1, limit=4
    $region2: #{tpu_custom_call.1} parent=1 // loop_pre_header
      _
    $region3: #{tpu_custom_call.1} parent=1 // loop_header
      %s11 = sphi 0, %s15
      %p12 = scmp.ge.s32.totalorder %s11, 4
      %s21 = sphi 0, %s23
      %s24 = sphi 0, %s21
      %s25 = sphi 0, %s24
      %s41 = sphi 0, %s25
      %s47 = sphi 0, %s49
      %s50 = sphi 0, %s47
      %s51 = sphi 0, %s50
      %s67 = sphi 0, %s51
      %s73 = sphi 0, %s75
      %s76 = sphi 0, %s73
      %s77 = sphi 0, %s76
      %s93 = sphi 0, %s77
    $region4: #{tpu_custom_call.1} parent=1 // loop_header_branch
      %14 = sbr.rel (%p12) target = $region8
    $region5: #{tpu_custom_call.1} parent=1 // loop_body
      %s16 = ssub.s32 %s11, 1
      %s17 = ssub.s32 %s11, 2
      %s18 = sadd.s32 %s11, 1
      %s19 = ssub.s32 %s11, %s18
      %p20 = scmp.eq.s32.totalorder %s19, 0
      %s22 = sadd.s32 %s21, 1
      %s23 = scalar_select %p20, %s21, %s22
      %p26 = pneg %p20
      %p27 = scmp.eq.s32.totalorder %s11, 1
      %p28 = por %p26, %p27
      %p29 = scmp.ne.s32.totalorder %s21, %s24
      %p30 = scmp.eq.s32.totalorder %s11, 0
      %p31 = por %p29, %p30
      %p32 = scmp.ne.s32.totalorder %s21, %s24
      %p33 = scmp.eq.s32.totalorder %s16, 1
      %p34 = por %p32, %p33
      %p35 = scmp.ne.s32.totalorder %s24, %s25
      %p36 = scmp.eq.s32.totalorder %s16, 0
      %p37 = por %p35, %p36
      %p38 = scmp.ne.s32.totalorder %s24, %s25
      %p39 = scmp.eq.s32.totalorder %s17, 1
      %p40 = por %p38, %p39
      %p42 = scmp.ne.s32.totalorder %s25, %s41
      %p43 = scmp.eq.s32.totalorder %s17, 0
      %p44 = por %p42, %p43
      %s45 = ssub.s32 %s11, %s18
      %p46 = scmp.eq.s32.totalorder %s45, 0
      %s48 = sadd.s32 %s47, 1
      %s49 = scalar_select %p46, %s47, %s48
      %p52 = pneg %p46
      %p53 = scmp.eq.s32.totalorder %s11, 1
      %p54 = por %p52, %p53
      %p55 = scmp.ne.s32.totalorder %s47, %s50
      %p56 = scmp.eq.s32.totalorder %s11, 0
      %p57 = por %p55, %p56
      %p58 = scmp.ne.s32.totalorder %s47, %s50
      %p59 = scmp.eq.s32.totalorder %s16, 1
      %p60 = por %p58, %p59
      %p61 = scmp.ne.s32.totalorder %s50, %s51
      %p62 = scmp.eq.s32.totalorder %s16, 0
      %p63 = por %p61, %p62
      %p64 = scmp.ne.s32.totalorder %s50, %s51
      %p65 = scmp.eq.s32.totalorder %s17, 1
      %p66 = por %p64, %p65
      %p68 = scmp.ne.s32.totalorder %s51, %s67
      %p69 = scmp.eq.s32.totalorder %s17, 0
      %p70 = por %p68, %p69
      %s71 = ssub.s32 %s11, %s18
      %p72 = scmp.eq.s32.totalorder %s71, 0
      %s74 = sadd.s32 %s73, 1
      %s75 = scalar_select %p72, %s73, %s74
      %p78 = pneg %p72
      %p79 = scmp.eq.s32.totalorder %s11, 1
      %p80 = por %p78, %p79
      %p81 = scmp.ne.s32.totalorder %s73, %s76
      %p82 = scmp.eq.s32.totalorder %s11, 0
      %p83 = por %p81, %p82
      %p84 = scmp.ne.s32.totalorder %s73, %s76
      %p85 = scmp.eq.s32.totalorder %s16, 1
      %p86 = por %p84, %p85
      %p87 = scmp.ne.s32.totalorder %s76, %s77
      %p88 = scmp.eq.s32.totalorder %s16, 0
      %p89 = por %p87, %p88
      %p90 = scmp.ne.s32.totalorder %s76, %s77
      %p91 = scmp.eq.s32.totalorder %s17, 1
      %p92 = por %p90, %p91
      %p94 = scmp.ne.s32.totalorder %s77, %s93
      %p95 = scmp.eq.s32.totalorder %s17, 0
      %p96 = por %p94, %p95
      %p97 = scmp.le.s32.totalorder 1, %s11
      %p98 = scmp.lt.s32.totalorder %s11, 3
      %p99 = pnand %p97, %p98
      %p100 = pneg %p99
      // Predicated region
      $region9: #{tpu_custom_call.1} parent=5 // pred_check
        _
      $region10: #{tpu_custom_call.1} parent=5 // pred_check_branch
        %102 = sbr.rel (%p99) target = $region12
      $region11: #{tpu_custom_call.1} parent=5 // pred_region
        %s103 = ssub.s32 %s11, 1
      $region12: #{tpu_custom_call.1} parent=5 // pred_fallthru
        _
      %p104 = scmp.lt.s32.totalorder %s11, 2
      // Predicated region
      $region13: #{tpu_custom_call.1} parent=5 // pred_check
        %p105 = pneg %p104
      $region14: #{tpu_custom_call.1} parent=5 // pred_check_branch
        %107 = sbr.rel (%p105) target = $region16
      $region15: #{tpu_custom_call.1} parent=5 // pred_region
        // Predicated region
        $region17: #{tpu_custom_call.1} parent=15 // pred_check
          %p108 = pneg %p31
        $region18: #{tpu_custom_call.1} parent=15 // pred_check_branch
          %110 = sbr.rel (%p108) target = $region20
        $region19: #{tpu_custom_call.1} parent=15 // pred_region
          %p111 = scmp.lt.s32.totalorder %s11, 1
          %s112 = scalar_select %p111, %s11, 1
          %s113 = smul.addr %s112, 20
          %s114 = smul.addr %s113, 8
          %s115 = scalar_lea.vmem %s0, %s114
        $region20: #{tpu_custom_call.1} parent=15 // pred_fallthru
          _
        // Predicated region
        $region21: #{tpu_custom_call.1} parent=15 // pred_check
          %p116 = pneg %p57
        $region22: #{tpu_custom_call.1} parent=15 // pred_check_branch
          %118 = sbr.rel (%p116) target = $region24
        $region23: #{tpu_custom_call.1} parent=15 // pred_region
          %p119 = scmp.lt.s32.totalorder %s11, 1
          %s120 = scalar_select %p119, %s11, 1
          %s121 = smul.addr %s120, 20
          %s122 = smul.addr %s121, 8
          %s123 = scalar_lea.vmem %s1, %s122
        $region24: #{tpu_custom_call.1} parent=15 // pred_fallthru
          _
      $region16: #{tpu_custom_call.1} parent=5 // pred_fallthru
        _
      %p124 = scmp.le.s32.totalorder 1, %s11
      %p125 = scmp.lt.s32.totalorder %s11, 3
      %p126 = pnand %p124, %p125
      %p127 = pneg %p126
      // Predicated region
      $region25: #{tpu_custom_call.1} parent=5 // pred_check
        _
      $region26: #{tpu_custom_call.1} parent=5 // pred_check_branch
        %129 = sbr.rel (%p126) target = $region28
      $region27: #{tpu_custom_call.1} parent=5 // pred_region
        %s130 = ssub.s32 %s11, 1
        %p131 = scmp.lt.s32.totalorder %s16, 1
        %s132 = scalar_select %p131, %s16, 1
        %s133 = smul.addr %s132, 20
        %s134 = smul.addr %s133, 8
        %s135 = scalar_lea.vmem %s0, %s134
        %p136 = pneg %p37
        %p137 = pneg %p34
        %p138 = scmp.lt.s32.totalorder %s16, 1
        %s139 = scalar_select %p138, %s16, 1
        %s140 = smul.addr %s139, 20
        %s141 = smul.addr %s140, 8
        %s142 = scalar_lea.vmem %s1, %s141
        %p143 = pneg %p63
        %p144 = pneg %p60
        %p145 = pneg %p89
        %p146 = pneg %p86
        %s147 = sand.u32 %s76, 1
        %s148 = scalar_lea.sflag [#allocation3], %s147
        %s149 = sand.u32 %s76, 1
        %s150 = smul.addr %s149, 64
        %s151 = scalar_lea.vmem [#allocation2], %s150
        %p152 = scmp.lt.s32.totalorder %s16, 1
        %s153 = scalar_select %p152, %s16, 1
        %s154 = smul.addr %s153, 20
        %s155 = smul.addr %s154, 8
        %s156 = scalar_lea.vmem %s0, %s155
        %p157 = scmp.lt.s32.totalorder %s16, 1
        %s158 = scalar_select %p157, %s16, 1
        %s159 = smul.addr %s158, 20
        %s160 = smul.addr %s159, 8
        %s161 = scalar_lea.vmem %s1, %s160
        %v162 = vld [vmem:[%s156] sm:$0xff]
        %v163 = vld [vmem:[%s156 + $0x8] sm:$0x3]
        %v164 = vld [vmem:[%s156 + $0x10] sm:$0xff]
        %v165 = vld [vmem:[%s156 + $0x18] sm:$0x3]
        %v166 = vld [vmem:[%s156 + $0x20] sm:$0xff]
        %v167 = vld [vmem:[%s156 + $0x28] sm:$0x3]
        %v168 = vld [vmem:[%s156 + $0x30] sm:$0xff]
        %v169 = vld [vmem:[%s156 + $0x38] sm:$0x3]
        %v170 = vld [vmem:[%s156 + $0x40] sm:$0xff]
        %v171 = vld [vmem:[%s156 + $0x48] sm:$0x3]
        %v172 = vld [vmem:[%s156 + $0x50] sm:$0xff]
        %v173 = vld [vmem:[%s156 + $0x58] sm:$0x3]
        %v174 = vld [vmem:[%s156 + $0x60] sm:$0xff]
        %v175 = vld [vmem:[%s156 + $0x68] sm:$0x3]
        %v176 = vld [vmem:[%s156 + $0x70] sm:$0xff]
        %v177 = vld [vmem:[%s156 + $0x78] sm:$0x3]
        %v178 = vld [vmem:[%s156 + $0x80] sm:$0xff]
        %v179 = vld [vmem:[%s156 + $0x88] sm:$0x3]
        %v180 = vld [vmem:[%s156 + $0x90] sm:$0xff]
        %v181 = vld [vmem:[%s156 + $0x98] sm:$0x3]
        %v182 = vld [vmem:[%s161] sm:$0xff]
        %v183 = vld [vmem:[%s161 + $0x8] sm:$0x3]
        %v184 = vld [vmem:[%s161 + $0x10] sm:$0xff]
        %v185 = vld [vmem:[%s161 + $0x18] sm:$0x3]
        %v186 = vld [vmem:[%s161 + $0x20] sm:$0xff]
        %v187 = vld [vmem:[%s161 + $0x28] sm:$0x3]
        %v188 = vld [vmem:[%s161 + $0x30] sm:$0xff]
        %v189 = vld [vmem:[%s161 + $0x38] sm:$0x3]
        %v190 = vld [vmem:[%s161 + $0x40] sm:$0xff]
        %v191 = vld [vmem:[%s161 + $0x48] sm:$0x3]
        %v192 = vld [vmem:[%s161 + $0x50] sm:$0xff]
        %v193 = vld [vmem:[%s161 + $0x58] sm:$0x3]
        %v194 = vld [vmem:[%s161 + $0x60] sm:$0xff]
        %v195 = vld [vmem:[%s161 + $0x68] sm:$0x3]
        %v196 = vld [vmem:[%s161 + $0x70] sm:$0xff]
        %v197 = vld [vmem:[%s161 + $0x78] sm:$0x3]
        %v198 = vld [vmem:[%s161 + $0x80] sm:$0xff]
        %v199 = vld [vmem:[%s161 + $0x88] sm:$0x3]
        %v200 = vld [vmem:[%s161 + $0x90] sm:$0xff]
        %v201 = vld [vmem:[%s161 + $0x98] sm:$0x3]
        %203 = vset.pattern.permute.xlu0 0
        %204 = vperm.xlu0 %203, %v182
        %v205 = vpop.permute.xlu0 %204
        %208 = vset.pattern.permute.xlu0 0
        %209 = vperm.xlu0 %208, %v183
        %v210 = vpop.permute.xlu0 %209
        %213 = vset.pattern.permute.xlu0 0
        %214 = vperm.xlu0 %213, %v184
        %v215 = vpop.permute.xlu0 %214
        %218 = vset.pattern.permute.xlu0 0
        %219 = vperm.xlu0 %218, %v185
        %v220 = vpop.permute.xlu0 %219
        %223 = vset.pattern.permute.xlu0 0
        %224 = vperm.xlu0 %223, %v186
        %v225 = vpop.permute.xlu0 %224
        %228 = vset.pattern.permute.xlu0 0
        %229 = vperm.xlu0 %228, %v187
        %v230 = vpop.permute.xlu0 %229
        %233 = vset.pattern.permute.xlu0 0
        %234 = vperm.xlu0 %233, %v188
        %v235 = vpop.permute.xlu0 %234
        %238 = vset.pattern.permute.xlu0 0
        %239 = vperm.xlu0 %238, %v189
        %v240 = vpop.permute.xlu0 %239
        %243 = vset.pattern.permute.xlu0 0
        %244 = vperm.xlu0 %243, %v190
        %v245 = vpop.permute.xlu0 %244
        %248 = vset.pattern.permute.xlu0 0
        %249 = vperm.xlu0 %248, %v191
        %v250 = vpop.permute.xlu0 %249
        %253 = vset.pattern.permute.xlu0 0
        %254 = vperm.xlu0 %253, %v192
        %v255 = vpop.permute.xlu0 %254
        %258 = vset.pattern.permute.xlu0 0
        %259 = vperm.xlu0 %258, %v193
        %v260 = vpop.permute.xlu0 %259
        %263 = vset.pattern.permute.xlu0 0
        %264 = vperm.xlu0 %263, %v194
        %v265 = vpop.permute.xlu0 %264
        %268 = vset.pattern.permute.xlu0 0
        %269 = vperm.xlu0 %268, %v195
        %v270 = vpop.permute.xlu0 %269
        %273 = vset.pattern.permute.xlu0 0
        %274 = vperm.xlu0 %273, %v196
        %v275 = vpop.permute.xlu0 %274
        %278 = vset.pattern.permute.xlu0 0
        %279 = vperm.xlu0 %278, %v197
        %v280 = vpop.permute.xlu0 %279
        %283 = vset.pattern.permute.xlu0 0
        %284 = vperm.xlu0 %283, %v198
        %v285 = vpop.permute.xlu0 %284
        %288 = vset.pattern.permute.xlu0 0
        %289 = vperm.xlu0 %288, %v199
        %v290 = vpop.permute.xlu0 %289
        %293 = vset.pattern.permute.xlu0 0
        %294 = vperm.xlu0 %293, %v200
        %v295 = vpop.permute.xlu0 %294
        %298 = vset.pattern.permute.xlu0 0
        %299 = vperm.xlu0 %298, %v201
        %v300 = vpop.permute.xlu0 %299
        %v302 = vmul.f32 %v162, %v205
        %v303 = vmul.f32 %v163, %v210
        %v304 = vmul.f32 %v164, %v215
        %v305 = vmul.f32 %v165, %v220
        %v306 = vmul.f32 %v166, %v225
        %v307 = vmul.f32 %v167, %v230
        %v308 = vmul.f32 %v168, %v235
        %v309 = vmul.f32 %v169, %v240
        %v310 = vmul.f32 %v170, %v245
        %v311 = vmul.f32 %v171, %v250
        %v312 = vmul.f32 %v172, %v255
        %v313 = vmul.f32 %v173, %v260
        %v314 = vmul.f32 %v174, %v265
        %v315 = vmul.f32 %v175, %v270
        %v316 = vmul.f32 %v176, %v275
        %v317 = vmul.f32 %v177, %v280
        %v318 = vmul.f32 %v178, %v285
        %v319 = vmul.f32 %v179, %v290
        %v320 = vmul.f32 %v180, %v295
        %v321 = vmul.f32 %v181, %v300
        %v322 = vmul.f32 %v302, 0.10186806
        %v323 = vmul.f32 %v304, 0.10186806
        %v324 = vmul.f32 %v306, 0.10186806
        %v325 = vmul.f32 %v308, 0.10186806
        %v326 = vmul.f32 %v310, 0.10186806
        %v327 = vmul.f32 %v312, 0.10186806
        %v328 = vmul.f32 %v314, 0.10186806
        %v329 = vmul.f32 %v316, 0.10186806
        %v330 = vadd.f32 %v322, 0.0
        %v331 = vadd.f32 %v323, 0.0
        %v332 = vadd.f32 %v324, 0.0
        %v333 = vadd.f32 %v325, 0.0
        %v334 = vadd.f32 %v326, 0.0
        %v335 = vadd.f32 %v327, 0.0
        %v336 = vadd.f32 %v328, 0.0
        %v337 = vadd.f32 %v329, 0.0
        %v338 = vmul.f32 %v182, 0.10186806
        %v339 = vmul.f32 %v184, 0.10186806
        %v340 = vmul.f32 %v186, 0.10186806
        %v341 = vmul.f32 %v188, 0.10186806
        %v342 = vmul.f32 %v190, 0.10186806
        %v343 = vmul.f32 %v192, 0.10186806
        %v344 = vmul.f32 %v194, 0.10186806
        %v345 = vmul.f32 %v196, 0.10186806
        %v346 = vadd.f32 %v338, 0.0
        %v347 = vadd.f32 %v339, 0.0
        %v348 = vadd.f32 %v340, 0.0
        %v349 = vadd.f32 %v341, 0.0
        %v350 = vadd.f32 %v342, 0.0
        %v351 = vadd.f32 %v343, 0.0
        %v352 = vadd.f32 %v344, 0.0
        %v353 = vadd.f32 %v345, 0.0
        %v354 = vmul.f32 %v302, 0.11543164
        %v355 = vmul.f32 %v303, 0.11543164
        %v356 = vmul.f32 %v304, 0.11543164
        %v357 = vmul.f32 %v305, 0.11543164
        %v358 = vmul.f32 %v306, 0.11543164
        %v359 = vmul.f32 %v307, 0.11543164
        %v360 = vmul.f32 %v308, 0.11543164
        %v361 = vmul.f32 %v309, 0.11543164
        %v362 = vmul.f32 %v310, 0.11543164
        %v363 = vmul.f32 %v311, 0.11543164
        %v364 = vmul.f32 %v312, 0.11543164
        %v365 = vmul.f32 %v313, 0.11543164
        %v366 = vmul.f32 %v314, 0.11543164
        %v367 = vmul.f32 %v315, 0.11543164
        %v368 = vmul.f32 %v316, 0.11543164
        %v369 = vmul.f32 %v317, 0.11543164
        %vm386 = vcmask 1046528
        %v387 = vrot.slane %v354, 1
        %v388 = vrot.slane %v355, 1
        %v389 = vsel %vm386, %v387, %v388
        %v390 = vrot.slane %v356, 1
        %v391 = vrot.slane %v357, 1
        %v392 = vsel %vm386, %v390, %v391
        %v393 = vrot.slane %v358, 1
        %v394 = vrot.slane %v359, 1
        %v395 = vsel %vm386, %v393, %v394
        %v396 = vrot.slane %v360, 1
        %v397 = vrot.slane %v361, 1
        %v398 = vsel %vm386, %v396, %v397
        %v399 = vrot.slane %v362, 1
        %v400 = vrot.slane %v363, 1
        %v401 = vsel %vm386, %v399, %v400
        %v402 = vrot.slane %v364, 1
        %v403 = vrot.slane %v365, 1
        %v404 = vsel %vm386, %v402, %v403
        %v405 = vrot.slane %v366, 1
        %v406 = vrot.slane %v367, 1
        %v407 = vsel %vm386, %v405, %v406
        %v408 = vrot.slane %v368, 1
        %v409 = vrot.slane %v369, 1
        %v410 = vsel %vm386, %v408, %v409
        %v419 = vadd.f32 %v330, %v389
        %v420 = vadd.f32 %v331, %v392
        %v421 = vadd.f32 %v332, %v395
        %v422 = vadd.f32 %v333, %v398
        %v423 = vadd.f32 %v334, %v401
        %v424 = vadd.f32 %v335, %v404
        %v425 = vadd.f32 %v336, %v407
        %v426 = vadd.f32 %v337, %v410
        %v427 = vmul.f32 %v182, 0.11543164
        %v428 = vmul.f32 %v183, 0.11543164
        %v429 = vmul.f32 %v184, 0.11543164
        %v430 = vmul.f32 %v185, 0.11543164
        %v431 = vmul.f32 %v186, 0.11543164
        %v432 = vmul.f32 %v187, 0.11543164
        %v433 = vmul.f32 %v188, 0.11543164
        %v434 = vmul.f32 %v189, 0.11543164
        %v435 = vmul.f32 %v190, 0.11543164
        %v436 = vmul.f32 %v191, 0.11543164
        %v437 = vmul.f32 %v192, 0.11543164
        %v438 = vmul.f32 %v193, 0.11543164
        %v439 = vmul.f32 %v194, 0.11543164
        %v440 = vmul.f32 %v195, 0.11543164
        %v441 = vmul.f32 %v196, 0.11543164
        %v442 = vmul.f32 %v197, 0.11543164
        %v459 = vrot.slane %v427, 1
        %v460 = vrot.slane %v428, 1
        %v461 = vsel %vm386, %v459, %v460
        %v462 = vrot.slane %v429, 1
        %v463 = vrot.slane %v430, 1
        %v464 = vsel %vm386, %v462, %v463
        %v465 = vrot.slane %v431, 1
        %v466 = vrot.slane %v432, 1
        %v467 = vsel %vm386, %v465, %v466
        %v468 = vrot.slane %v433, 1
        %v469 = vrot.slane %v434, 1
        %v470 = vsel %vm386, %v468, %v469
        %v471 = vrot.slane %v435, 1
        %v472 = vrot.slane %v436, 1
        %v473 = vsel %vm386, %v471, %v472
        %v474 = vrot.slane %v437, 1
        %v475 = vrot.slane %v438, 1
        %v476 = vsel %vm386, %v474, %v475
        %v477 = vrot.slane %v439, 1
        %v478 = vrot.slane %v440, 1
        %v479 = vsel %vm386, %v477, %v478
        %v480 = vrot.slane %v441, 1
        %v481 = vrot.slane %v442, 1
        %v482 = vsel %vm386, %v480, %v481
        %v491 = vadd.f32 %v346, %v461
        %v492 = vadd.f32 %v347, %v464
        %v493 = vadd.f32 %v348, %v467
        %v494 = vadd.f32 %v349, %v470
        %v495 = vadd.f32 %v350, %v473
        %v496 = vadd.f32 %v351, %v476
        %v497 = vadd.f32 %v352, %v479
        %v498 = vadd.f32 %v353, %v482
        %v499 = vmul.f32 %v303, 0.10186806
        %v500 = vmul.f32 %v305, 0.10186806
        %v501 = vmul.f32 %v307, 0.10186806
        %v502 = vmul.f32 %v309, 0.10186806
        %v503 = vmul.f32 %v311, 0.10186806
        %v504 = vmul.f32 %v313, 0.10186806
        %v505 = vmul.f32 %v315, 0.10186806
        %v506 = vmul.f32 %v317, 0.10186806
        %vm523 = vcmask 1045504
        %v524 = vrot.slane %v322, 2
        %v525 = vrot.slane %v499, 2
        %v526 = vsel %vm523, %v524, %v525
        %v527 = vrot.slane %v323, 2
        %v528 = vrot.slane %v500, 2
        %v529 = vsel %vm523, %v527, %v528
        %v530 = vrot.slane %v324, 2
        %v531 = vrot.slane %v501, 2
        %v532 = vsel %vm523, %v530, %v531
        %v533 = vrot.slane %v325, 2
        %v534 = vrot.slane %v502, 2
        %v535 = vsel %vm523, %v533, %v534
        %v536 = vrot.slane %v326, 2
        %v537 = vrot.slane %v503, 2
        %v538 = vsel %vm523, %v536, %v537
        %v539 = vrot.slane %v327, 2
        %v540 = vrot.slane %v504, 2
        %v541 = vsel %vm523, %v539, %v540
        %v542 = vrot.slane %v328, 2
        %v543 = vrot.slane %v505, 2
        %v544 = vsel %vm523, %v542, %v543
        %v545 = vrot.slane %v329, 2
        %v546 = vrot.slane %v506, 2
        %v547 = vsel %vm523, %v545, %v546
        %v556 = vadd.f32 %v419, %v526
        %v557 = vadd.f32 %v420, %v529
        %v558 = vadd.f32 %v421, %v532
        %v559 = vadd.f32 %v422, %v535
        %v560 = vadd.f32 %v423, %v538
        %v561 = vadd.f32 %v424, %v541
        %v562 = vadd.f32 %v425, %v544
        %v563 = vadd.f32 %v426, %v547
        %v564 = vmul.f32 %v183, 0.10186806
        %v565 = vmul.f32 %v185, 0.10186806
        %v566 = vmul.f32 %v187, 0.10186806
        %v567 = vmul.f32 %v189, 0.10186806
        %v568 = vmul.f32 %v191, 0.10186806
        %v569 = vmul.f32 %v193, 0.10186806
        %v570 = vmul.f32 %v195, 0.10186806
        %v571 = vmul.f32 %v197, 0.10186806
        %v588 = vrot.slane %v338, 2
        %v589 = vrot.slane %v564, 2
        %v590 = vsel %vm523, %v588, %v589
        %v591 = vrot.slane %v339, 2
        %v592 = vrot.slane %v565, 2
        %v593 = vsel %vm523, %v591, %v592
        %v594 = vrot.slane %v340, 2
        %v595 = vrot.slane %v566, 2
        %v596 = vsel %vm523, %v594, %v595
        %v597 = vrot.slane %v341, 2
        %v598 = vrot.slane %v567, 2
        %v599 = vsel %vm523, %v597, %v598
        %v600 = vrot.slane %v342, 2
        %v601 = vrot.slane %v568, 2
        %v602 = vsel %vm523, %v600, %v601
        %v603 = vrot.slane %v343, 2
        %v604 = vrot.slane %v569, 2
        %v605 = vsel %vm523, %v603, %v604
        %v606 = vrot.slane %v344, 2
        %v607 = vrot.slane %v570, 2
        %v608 = vsel %vm523, %v606, %v607
        %v609 = vrot.slane %v345, 2
        %v610 = vrot.slane %v571, 2
        %v611 = vsel %vm523, %v609, %v610
        %v620 = vadd.f32 %v491, %v590
        %v621 = vadd.f32 %v492, %v593
        %v622 = vadd.f32 %v493, %v596
        %v623 = vadd.f32 %v494, %v599
        %v624 = vadd.f32 %v495, %v602
        %v625 = vadd.f32 %v496, %v605
        %v626 = vadd.f32 %v497, %v608
        %v627 = vadd.f32 %v498, %v611
        %v628 = vmul.f32 %v318, 0.11543164
        %v629 = vadd.f32 %v556, %v356
        %v630 = vadd.f32 %v557, %v358
        %v631 = vadd.f32 %v558, %v360
        %v632 = vadd.f32 %v559, %v362
        %v633 = vadd.f32 %v560, %v364
        %v634 = vadd.f32 %v561, %v366
        %v635 = vadd.f32 %v562, %v368
        %v636 = vadd.f32 %v563, %v628
        %v637 = vmul.f32 %v198, 0.11543164
        %v638 = vadd.f32 %v620, %v429
        %v639 = vadd.f32 %v621, %v431
        %v640 = vadd.f32 %v622, %v433
        %v641 = vadd.f32 %v623, %v435
        %v642 = vadd.f32 %v624, %v437
        %v643 = vadd.f32 %v625, %v439
        %v644 = vadd.f32 %v626, %v441
        %v645 = vadd.f32 %v627, %v637
        %v646 = vmul.f32 %v304, 0.13080119
        %v647 = vmul.f32 %v305, 0.13080119
        %v648 = vmul.f32 %v306, 0.13080119
        %v649 = vmul.f32 %v307, 0.13080119
        %v650 = vmul.f32 %v308, 0.13080119
        %v651 = vmul.f32 %v309, 0.13080119
        %v652 = vmul.f32 %v310, 0.13080119
        %v653 = vmul.f32 %v311, 0.13080119
        %v654 = vmul.f32 %v312, 0.13080119
        %v655 = vmul.f32 %v313, 0.13080119
        %v656 = vmul.f32 %v314, 0.13080119
        %v657 = vmul.f32 %v315, 0.13080119
        %v658 = vmul.f32 %v316, 0.13080119
        %v659 = vmul.f32 %v317, 0.13080119
        %v660 = vmul.f32 %v318, 0.13080119
        %v661 = vmul.f32 %v319, 0.13080119
        %v678 = vrot.slane %v646, 1
        %v679 = vrot.slane %v647, 1
        %v680 = vsel %vm386, %v678, %v679
        %v681 = vrot.slane %v648, 1
        %v682 = vrot.slane %v649, 1
        %v683 = vsel %vm386, %v681, %v682
        %v684 = vrot.slane %v650, 1
        %v685 = vrot.slane %v651, 1
        %v686 = vsel %vm386, %v684, %v685
        %v687 = vrot.slane %v652, 1
        %v688 = vrot.slane %v653, 1
        %v689 = vsel %vm386, %v687, %v688
        %v690 = vrot.slane %v654, 1
        %v691 = vrot.slane %v655, 1
        %v692 = vsel %vm386, %v690, %v691
        %v693 = vrot.slane %v656, 1
        %v694 = vrot.slane %v657, 1
        %v695 = vsel %vm386, %v693, %v694
        %v696 = vrot.slane %v658, 1
        %v697 = vrot.slane %v659, 1
        %v698 = vsel %vm386, %v696, %v697
        %v699 = vrot.slane %v660, 1
        %v700 = vrot.slane %v661, 1
        %v701 = vsel %vm386, %v699, %v700
        %v710 = vadd.f32 %v629, %v680
        %v711 = vadd.f32 %v630, %v683
        %v712 = vadd.f32 %v631, %v686
        %v713 = vadd.f32 %v632, %v689
        %v714 = vadd.f32 %v633, %v692
        %v715 = vadd.f32 %v634, %v695
        %v716 = vadd.f32 %v635, %v698
        %v717 = vadd.f32 %v636, %v701
        %v718 = vmul.f32 %v184, 0.13080119
        %v719 = vmul.f32 %v185, 0.13080119
        %v720 = vmul.f32 %v186, 0.13080119
        %v721 = vmul.f32 %v187, 0.13080119
        %v722 = vmul.f32 %v188, 0.13080119
        %v723 = vmul.f32 %v189, 0.13080119
        %v724 = vmul.f32 %v190, 0.13080119
        %v725 = vmul.f32 %v191, 0.13080119
        %v726 = vmul.f32 %v192, 0.13080119
        %v727 = vmul.f32 %v193, 0.13080119
        %v728 = vmul.f32 %v194, 0.13080119
        %v729 = vmul.f32 %v195, 0.13080119
        %v730 = vmul.f32 %v196, 0.13080119
        %v731 = vmul.f32 %v197, 0.13080119
        %v732 = vmul.f32 %v198, 0.13080119
        %v733 = vmul.f32 %v199, 0.13080119
        %v750 = vrot.slane %v718, 1
        %v751 = vrot.slane %v719, 1
        %v752 = vsel %vm386, %v750, %v751
        %v753 = vrot.slane %v720, 1
        %v754 = vrot.slane %v721, 1
        %v755 = vsel %vm386, %v753, %v754
        %v756 = vrot.slane %v722, 1
        %v757 = vrot.slane %v723, 1
        %v758 = vsel %vm386, %v756, %v757
        %v759 = vrot.slane %v724, 1
        %v760 = vrot.slane %v725, 1
        %v761 = vsel %vm386, %v759, %v760
        %v762 = vrot.slane %v726, 1
        %v763 = vrot.slane %v727, 1
        %v764 = vsel %vm386, %v762, %v763
        %v765 = vrot.slane %v728, 1
        %v766 = vrot.slane %v729, 1
        %v767 = vsel %vm386, %v765, %v766
        %v768 = vrot.slane %v730, 1
        %v769 = vrot.slane %v731, 1
        %v770 = vsel %vm386, %v768, %v769
        %v771 = vrot.slane %v732, 1
        %v772 = vrot.slane %v733, 1
        %v773 = vsel %vm386, %v771, %v772
        %v782 = vadd.f32 %v638, %v752
        %v783 = vadd.f32 %v639, %v755
        %v784 = vadd.f32 %v640, %v758
        %v785 = vadd.f32 %v641, %v761
        %v786 = vadd.f32 %v642, %v764
        %v787 = vadd.f32 %v643, %v767
        %v788 = vadd.f32 %v644, %v770
        %v789 = vadd.f32 %v645, %v773
        %v790 = vmul.f32 %v319, 0.11543164
        %v793 = vrot.slane %v356, 2
        %v794 = vrot.slane %v357, 2
        %v795 = vsel %vm523, %v793, %v794
        %v796 = vrot.slane %v358, 2
        %v797 = vrot.slane %v359, 2
        %v798 = vsel %vm523, %v796, %v797
        %v799 = vrot.slane %v360, 2
        %v800 = vrot.slane %v361, 2
        %v801 = vsel %vm523, %v799, %v800
        %v802 = vrot.slane %v362, 2
        %v803 = vrot.slane %v363, 2
        %v804 = vsel %vm523, %v802, %v803
        %v805 = vrot.slane %v364, 2
        %v806 = vrot.slane %v365, 2
        %v807 = vsel %vm523, %v805, %v806
        %v808 = vrot.slane %v366, 2
        %v809 = vrot.slane %v367, 2
        %v810 = vsel %vm523, %v808, %v809
        %v811 = vrot.slane %v368, 2
        %v812 = vrot.slane %v369, 2
        %v813 = vsel %vm523, %v811, %v812
        %v814 = vrot.slane %v628, 2
        %v815 = vrot.slane %v790, 2
        %v816 = vsel %vm523, %v814, %v815
        %v825 = vadd.f32 %v710, %v795
        %v826 = vadd.f32 %v711, %v798
        %v827 = vadd.f32 %v712, %v801
        %v828 = vadd.f32 %v713, %v804
        %v829 = vadd.f32 %v714, %v807
        %v830 = vadd.f32 %v715, %v810
        %v831 = vadd.f32 %v716, %v813
        %v832 = vadd.f32 %v717, %v816
        %v833 = vmul.f32 %v199, 0.11543164
        %v836 = vrot.slane %v429, 2
        %v837 = vrot.slane %v430, 2
        %v838 = vsel %vm523, %v836, %v837
        %v839 = vrot.slane %v431, 2
        %v840 = vrot.slane %v432, 2
        %v841 = vsel %vm523, %v839, %v840
        %v842 = vrot.slane %v433, 2
        %v843 = vrot.slane %v434, 2
        %v844 = vsel %vm523, %v842, %v843
        %v845 = vrot.slane %v435, 2
        %v846 = vrot.slane %v436, 2
        %v847 = vsel %vm523, %v845, %v846
        %v848 = vrot.slane %v437, 2
        %v849 = vrot.slane %v438, 2
        %v850 = vsel %vm523, %v848, %v849
        %v851 = vrot.slane %v439, 2
        %v852 = vrot.slane %v440, 2
        %v853 = vsel %vm523, %v851, %v852
        %v854 = vrot.slane %v441, 2
        %v855 = vrot.slane %v442, 2
        %v856 = vsel %vm523, %v854, %v855
        %v857 = vrot.slane %v637, 2
        %v858 = vrot.slane %v833, 2
        %v859 = vsel %vm523, %v857, %v858
        %v868 = vadd.f32 %v782, %v838
        %v869 = vadd.f32 %v783, %v841
        %v870 = vadd.f32 %v784, %v844
        %v871 = vadd.f32 %v785, %v847
        %v872 = vadd.f32 %v786, %v850
        %v873 = vadd.f32 %v787, %v853
        %v874 = vadd.f32 %v788, %v856
        %v875 = vadd.f32 %v789, %v859
        %v876 = vmul.f32 %v318, 0.10186806
        %v877 = vmul.f32 %v320, 0.10186806
        %v878 = vadd.f32 %v825, %v324
        %v879 = vadd.f32 %v826, %v325
        %v880 = vadd.f32 %v827, %v326
        %v881 = vadd.f32 %v828, %v327
        %v882 = vadd.f32 %v829, %v328
        %v883 = vadd.f32 %v830, %v329
        %v884 = vadd.f32 %v831, %v876
        %v885 = vadd.f32 %v832, %v877
        %v886 = vmul.f32 %v198, 0.10186806
        %v887 = vmul.f32 %v200, 0.10186806
        %v888 = vadd.f32 %v868, %v340
        %v889 = vadd.f32 %v869, %v341
        %v890 = vadd.f32 %v870, %v342
        %v891 = vadd.f32 %v871, %v343
        %v892 = vadd.f32 %v872, %v344
        %v893 = vadd.f32 %v873, %v345
        %v894 = vadd.f32 %v874, %v886
        %v895 = vadd.f32 %v875, %v887
        %v896 = vmul.f32 %v320, 0.11543164
        %v897 = vmul.f32 %v321, 0.11543164
        %v900 = vrot.slane %v628, 1
        %v901 = vrot.slane %v790, 1
        %v902 = vsel %vm386, %v900, %v901
        %v903 = vrot.slane %v896, 1
        %v904 = vrot.slane %v897, 1
        %v905 = vsel %vm386, %v903, %v904
        %v908 = vadd.f32 %v878, %v395
        %v909 = vadd.f32 %v879, %v398
        %v910 = vadd.f32 %v880, %v401
        %v911 = vadd.f32 %v881, %v404
        %v912 = vadd.f32 %v882, %v407
        %v913 = vadd.f32 %v883, %v410
        %v914 = vadd.f32 %v884, %v902
        %v915 = vadd.f32 %v885, %v905
        %v916 = vmul.f32 %v200, 0.11543164
        %v917 = vmul.f32 %v201, 0.11543164
        %v920 = vrot.slane %v637, 1
        %v921 = vrot.slane %v833, 1
        %v922 = vsel %vm386, %v920, %v921
        %v923 = vrot.slane %v916, 1
        %v924 = vrot.slane %v917, 1
        %v925 = vsel %vm386, %v923, %v924
        %v928 = vadd.f32 %v888, %v467
        %v929 = vadd.f32 %v889, %v470
        %v930 = vadd.f32 %v890, %v473
        %v931 = vadd.f32 %v891, %v476
        %v932 = vadd.f32 %v892, %v479
        %v933 = vadd.f32 %v893, %v482
        %v934 = vadd.f32 %v894, %v922
        %v935 = vadd.f32 %v895, %v925
        %v936 = vmul.f32 %v319, 0.10186806
        %v937 = vmul.f32 %v321, 0.10186806
        %v942 = vrot.slane %v876, 2
        %v943 = vrot.slane %v936, 2
        %v944 = vsel %vm523, %v942, %v943
        %v945 = vrot.slane %v877, 2
        %v946 = vrot.slane %v937, 2
        %v947 = vsel %vm523, %v945, %v946
        %v950 = vadd.f32 %v908, %v532
        %v951 = vadd.f32 %v909, %v535
        %v952 = vadd.f32 %v910, %v538
        %v953 = vadd.f32 %v911, %v541
        %v954 = vadd.f32 %v912, %v544
        %v955 = vadd.f32 %v913, %v547
        %v956 = vadd.f32 %v914, %v944
        %v957 = vadd.f32 %v915, %v947
        %v958 = vmul.f32 %v199, 0.10186806
        %v959 = vmul.f32 %v201, 0.10186806
        %v964 = vrot.slane %v886, 2
        %v965 = vrot.slane %v958, 2
        %v966 = vsel %vm523, %v964, %v965
        %v967 = vrot.slane %v887, 2
        %v968 = vrot.slane %v959, 2
        %v969 = vsel %vm523, %v967, %v968
        %v972 = vadd.f32 %v928, %v596
        %v973 = vadd.f32 %v929, %v599
        %v974 = vadd.f32 %v930, %v602
        %v975 = vadd.f32 %v931, %v605
        %v976 = vadd.f32 %v932, %v608
        %v977 = vadd.f32 %v933, %v611
        %v978 = vadd.f32 %v934, %v966
        %v979 = vadd.f32 %v935, %v969
        %v980 = vadd.f32 %v972, 1e-06
        %v981 = vadd.f32 %v973, 1e-06
        %v982 = vadd.f32 %v974, 1e-06
        %v983 = vadd.f32 %v975, 1e-06
        %v984 = vadd.f32 %v976, 1e-06
        %v985 = vadd.f32 %v977, 1e-06
        %v986 = vadd.f32 %v978, 1e-06
        %v987 = vadd.f32 %v979, 1e-06
        %v988 = vrcp.pop %v980
        %v989 = vrcp.pop %v981
        %v990 = vrcp.pop %v982
        %v991 = vrcp.pop %v983
        %v992 = vrcp.pop %v984
        %v993 = vrcp.pop %v985
        %v994 = vrcp.pop %v986
        %v995 = vrcp.pop %v987
        %997 = vset.pattern.permute.xlu0 0
        %998 = vperm.xlu0 %997, %v988
        %v999 = vpop.permute.xlu0 %998
        %1002 = vset.pattern.permute.xlu0 0
        %1003 = vperm.xlu0 %1002, %v989
        %v1004 = vpop.permute.xlu0 %1003
        %1007 = vset.pattern.permute.xlu0 0
        %1008 = vperm.xlu0 %1007, %v990
        %v1009 = vpop.permute.xlu0 %1008
        %1012 = vset.pattern.permute.xlu0 0
        %1013 = vperm.xlu0 %1012, %v991
        %v1014 = vpop.permute.xlu0 %1013
        %1017 = vset.pattern.permute.xlu0 0
        %1018 = vperm.xlu0 %1017, %v992
        %v1019 = vpop.permute.xlu0 %1018
        %1022 = vset.pattern.permute.xlu0 0
        %1023 = vperm.xlu0 %1022, %v993
        %v1024 = vpop.permute.xlu0 %1023
        %1027 = vset.pattern.permute.xlu0 0
        %1028 = vperm.xlu0 %1027, %v994
        %v1029 = vpop.permute.xlu0 %1028
        %1032 = vset.pattern.permute.xlu0 0
        %1033 = vperm.xlu0 %1032, %v995
        %v1034 = vpop.permute.xlu0 %1033
        %v1036 = vmul.f32 %v950, %v999
        %v1037 = vmul.f32 %v951, %v1004
        %v1038 = vmul.f32 %v952, %v1009
        %v1039 = vmul.f32 %v953, %v1014
        %v1040 = vmul.f32 %v954, %v1019
        %v1041 = vmul.f32 %v955, %v1024
        %v1042 = vmul.f32 %v956, %v1029
        %v1043 = vmul.f32 %v957, %v1034
        %vm1044 = vcmp.gt.f32.partialorder %v972, 0.0
        %vm1045 = vcmp.gt.f32.partialorder %v973, 0.0
        %vm1046 = vcmp.gt.f32.partialorder %v974, 0.0
        %vm1047 = vcmp.gt.f32.partialorder %v975, 0.0
        %vm1048 = vcmp.gt.f32.partialorder %v976, 0.0
        %vm1049 = vcmp.gt.f32.partialorder %v977, 0.0
        %vm1050 = vcmp.gt.f32.partialorder %v978, 0.0
        %vm1051 = vcmp.gt.f32.partialorder %v979, 0.0
        %v1052 = vsel %vm1044, 1, 0
        %v1053 = vsel %vm1045, 1, 0
        %v1054 = vsel %vm1046, 1, 0
        %v1055 = vsel %vm1047, 1, 0
        %v1056 = vsel %vm1048, 1, 0
        %v1057 = vsel %vm1049, 1, 0
        %v1058 = vsel %vm1050, 1, 0
        %v1059 = vsel %vm1051, 1, 0
        %v1060 = vcvt.s32.f32 %v1052
        %v1061 = vcvt.s32.f32 %v1053
        %v1062 = vcvt.s32.f32 %v1054
        %v1063 = vcvt.s32.f32 %v1055
        %v1064 = vcvt.s32.f32 %v1056
        %v1065 = vcvt.s32.f32 %v1057
        %v1066 = vcvt.s32.f32 %v1058
        %v1067 = vcvt.s32.f32 %v1059
        %1069 = vset.pattern.permute.xlu0 0
        %1070 = vperm.xlu0 %1069, %v1060
        %v1071 = vpop.permute.xlu0 %1070
        %1074 = vset.pattern.permute.xlu0 0
        %1075 = vperm.xlu0 %1074, %v1061
        %v1076 = vpop.permute.xlu0 %1075
        %1079 = vset.pattern.permute.xlu0 0
        %1080 = vperm.xlu0 %1079, %v1062
        %v1081 = vpop.permute.xlu0 %1080
        %1084 = vset.pattern.permute.xlu0 0
        %1085 = vperm.xlu0 %1084, %v1063
        %v1086 = vpop.permute.xlu0 %1085
        %1089 = vset.pattern.permute.xlu0 0
        %1090 = vperm.xlu0 %1089, %v1064
        %v1091 = vpop.permute.xlu0 %1090
        %1094 = vset.pattern.permute.xlu0 0
        %1095 = vperm.xlu0 %1094, %v1065
        %v1096 = vpop.permute.xlu0 %1095
        %1099 = vset.pattern.permute.xlu0 0
        %1100 = vperm.xlu0 %1099, %v1066
        %v1101 = vpop.permute.xlu0 %1100
        %1104 = vset.pattern.permute.xlu0 0
        %1105 = vperm.xlu0 %1104, %v1067
        %v1106 = vpop.permute.xlu0 %1105
        %v1108 = vmul.f32 %v1036, %v1071
        %v1109 = vmul.f32 %v1037, %v1076
        %v1110 = vmul.f32 %v1038, %v1081
        %v1111 = vmul.f32 %v1039, %v1086
        %v1112 = vmul.f32 %v1040, %v1091
        %v1113 = vmul.f32 %v1041, %v1096
        %v1114 = vmul.f32 %v1042, %v1101
        %v1115 = vmul.f32 %v1043, %v1106
        %v1116 = vsub.f32 1.0, %v184
        %v1117 = vsub.f32 1.0, %v185
        %v1118 = vsub.f32 1.0, %v186
        %v1119 = vsub.f32 1.0, %v187
        %v1120 = vsub.f32 1.0, %v188
        %v1121 = vsub.f32 1.0, %v189
        %v1122 = vsub.f32 1.0, %v190
        %v1123 = vsub.f32 1.0, %v191
        %v1124 = vsub.f32 1.0, %v192
        %v1125 = vsub.f32 1.0, %v193
        %v1126 = vsub.f32 1.0, %v194
        %v1127 = vsub.f32 1.0, %v195
        %v1128 = vsub.f32 1.0, %v196
        %v1129 = vsub.f32 1.0, %v197
        %v1130 = vsub.f32 1.0, %v198
        %v1131 = vsub.f32 1.0, %v199
        %1133 = vset.pattern.permute.xlu0 0
        %1134 = vperm.xlu0 %1133, %v1116
        %v1135 = vpop.permute.xlu0 %1134
        %1138 = vset.pattern.permute.xlu0 0
        %1139 = vperm.xlu0 %1138, %v1117
        %v1140 = vpop.permute.xlu0 %1139
        %1143 = vset.pattern.permute.xlu0 0
        %1144 = vperm.xlu0 %1143, %v1118
        %v1145 = vpop.permute.xlu0 %1144
        %1148 = vset.pattern.permute.xlu0 0
        %1149 = vperm.xlu0 %1148, %v1119
        %v1150 = vpop.permute.xlu0 %1149
        %1153 = vset.pattern.permute.xlu0 0
        %1154 = vperm.xlu0 %1153, %v1120
        %v1155 = vpop.permute.xlu0 %1154
        %1158 = vset.pattern.permute.xlu0 0
        %1159 = vperm.xlu0 %1158, %v1121
        %v1160 = vpop.permute.xlu0 %1159
        %1163 = vset.pattern.permute.xlu0 0
        %1164 = vperm.xlu0 %1163, %v1122
        %v1165 = vpop.permute.xlu0 %1164
        %1168 = vset.pattern.permute.xlu0 0
        %1169 = vperm.xlu0 %1168, %v1123
        %v1170 = vpop.permute.xlu0 %1169
        %1173 = vset.pattern.permute.xlu0 0
        %1174 = vperm.xlu0 %1173, %v1124
        %v1175 = vpop.permute.xlu0 %1174
        %1178 = vset.pattern.permute.xlu0 0
        %1179 = vperm.xlu0 %1178, %v1125
        %v1180 = vpop.permute.xlu0 %1179
        %1183 = vset.pattern.permute.xlu0 0
        %1184 = vperm.xlu0 %1183, %v1126
        %v1185 = vpop.permute.xlu0 %1184
        %1188 = vset.pattern.permute.xlu0 0
        %1189 = vperm.xlu0 %1188, %v1127
        %v1190 = vpop.permute.xlu0 %1189
        %1193 = vset.pattern.permute.xlu0 0
        %1194 = vperm.xlu0 %1193, %v1128
        %v1195 = vpop.permute.xlu0 %1194
        %1198 = vset.pattern.permute.xlu0 0
        %1199 = vperm.xlu0 %1198, %v1129
        %v1200 = vpop.permute.xlu0 %1199
        %1203 = vset.pattern.permute.xlu0 0
        %1204 = vperm.xlu0 %1203, %v1130
        %v1205 = vpop.permute.xlu0 %1204
        %1208 = vset.pattern.permute.xlu0 0
        %1209 = vperm.xlu0 %1208, %v1131
        %v1210 = vpop.permute.xlu0 %1209
        %v1220 = vrot.slane %v1108, 7
        %v1221 = vrot.slane %v1109, 7
        %v1222 = vrot.slane %v1110, 7
        %v1223 = vrot.slane %v1111, 7
        %v1224 = vrot.slane %v1112, 7
        %v1225 = vrot.slane %v1113, 7
        %v1226 = vrot.slane %v1114, 7
        %v1227 = vrot.slane %v1115, 7
        %v1236 = vmul.f32 %v1135, %v1220
        %v1237 = vmul.f32 %v1140, %v1220
        %v1238 = vmul.f32 %v1145, %v1221
        %v1239 = vmul.f32 %v1150, %v1221
        %v1240 = vmul.f32 %v1155, %v1222
        %v1241 = vmul.f32 %v1160, %v1222
        %v1242 = vmul.f32 %v1165, %v1223
        %v1243 = vmul.f32 %v1170, %v1223
        %v1244 = vmul.f32 %v1175, %v1224
        %v1245 = vmul.f32 %v1180, %v1224
        %v1246 = vmul.f32 %v1185, %v1225
        %v1247 = vmul.f32 %v1190, %v1225
        %v1248 = vmul.f32 %v1195, %v1226
        %v1249 = vmul.f32 %v1200, %v1226
        %v1250 = vmul.f32 %v1205, %v1227
        %v1251 = vmul.f32 %v1210, %v1227
        %v1252 = vadd.f32 %v304, %v1236
        %v1253 = vadd.f32 %v305, %v1237
        %v1254 = vadd.f32 %v306, %v1238
        %v1255 = vadd.f32 %v307, %v1239
        %v1256 = vadd.f32 %v308, %v1240
        %v1257 = vadd.f32 %v309, %v1241
        %v1258 = vadd.f32 %v310, %v1242
        %v1259 = vadd.f32 %v311, %v1243
        %v1260 = vadd.f32 %v312, %v1244
        %v1261 = vadd.f32 %v313, %v1245
        %v1262 = vadd.f32 %v314, %v1246
        %v1263 = vadd.f32 %v315, %v1247
        %v1264 = vadd.f32 %v316, %v1248
        %v1265 = vadd.f32 %v317, %v1249
        %v1266 = vadd.f32 %v318, %v1250
        %v1267 = vadd.f32 %v319, %v1251
        %vm1268 = vcmask 261121
        %1269 = vst.msk [vmem:[%s151 - $0x1] sm:$0xfe] %vm1268, %v1252
        %vm1270 = vcmask 253952
        %1271 = vst.msk [vmem:[%s151 + $0x7] sm:$0x1] %vm1270, %v1253
        %1272 = vst.msk [vmem:[%s151 + $0x7] sm:$0xfe] %vm1268, %v1254
        %1273 = vst.msk [vmem:[%s151 + $0xf] sm:$0x1] %vm1270, %v1255
        %1274 = vst.msk [vmem:[%s151 + $0xf] sm:$0xfe] %vm1268, %v1256
        %1275 = vst.msk [vmem:[%s151 + $0x17] sm:$0x1] %vm1270, %v1257
        %1276 = vst.msk [vmem:[%s151 + $0x17] sm:$0xfe] %vm1268, %v1258
        %1277 = vst.msk [vmem:[%s151 + $0x1f] sm:$0x1] %vm1270, %v1259
        %1278 = vst.msk [vmem:[%s151 + $0x1f] sm:$0xfe] %vm1268, %v1260
        %1279 = vst.msk [vmem:[%s151 + $0x27] sm:$0x1] %vm1270, %v1261
        %1280 = vst.msk [vmem:[%s151 + $0x27] sm:$0xfe] %vm1268, %v1262
        %1281 = vst.msk [vmem:[%s151 + $0x2f] sm:$0x1] %vm1270, %v1263
        %1282 = vst.msk [vmem:[%s151 + $0x2f] sm:$0xfe] %vm1268, %v1264
        %1283 = vst.msk [vmem:[%s151 + $0x37] sm:$0x1] %vm1270, %v1265
        %1284 = vst.msk [vmem:[%s151 + $0x37] sm:$0xfe] %vm1268, %v1266
        %1285 = vst.msk [vmem:[%s151 + $0x3f] sm:$0x1] %vm1270, %v1267
        %s1286 = sand.u32 %s76, 1
        %s1287 = scalar_lea.sflag [#allocation3], %s1286
        %s1288 = sand.u32 %s76, 1
        %s1289 = smul.addr %s1288, 64
        %s1290 = scalar_lea.vmem [#allocation2], %s1289
        // Predicated region
        $region29: #{tpu_custom_call.1} parent=27 // pred_check
          %p1291 = pneg %p86
        $region30: #{tpu_custom_call.1} parent=27 // pred_check_branch
          %1293 = sbr.rel (%p1291) target = $region32
        $region31: #{tpu_custom_call.1} parent=27 // pred_region
          %1295 = vsyncadd %s1287, 0
          %s1296 = smul.addr %s16, 8
          %s1297 = smul.addr %s1296, 8
          %s1298 = scalar_lea.hbm %s2, %s1297
          %s1299 = sshll.u32 %s1290, 4
          %s1300 = int_to_ptr.vmem [resolvable:$true] %s1299
          %s1301 = sshll.u32 %s1298, 4
          %s1302 = int_to_ptr.hbm [resolvable:$true] %s1301
          %1307 = dma.vmem_to_hbm [thread:$0]  %s1300, 1024, %s1302, %s1287, 128, 128, 8
        $region32: #{tpu_custom_call.1} parent=27 // pred_fallthru
          _
      $region28: #{tpu_custom_call.1} parent=5 // pred_fallthru
        _
      %p1308 = scmp.le.s32.totalorder 2, %s11
      // Predicated region
      $region33: #{tpu_custom_call.1} parent=5 // pred_check
        %p1309 = pneg %p1308
      $region34: #{tpu_custom_call.1} parent=5 // pred_check_branch
        %1311 = sbr.rel (%p1309) target = $region36
      $region35: #{tpu_custom_call.1} parent=5 // pred_region
        %s1312 = ssub.s32 %s11, 2
        // Predicated region
        $region37: #{tpu_custom_call.1} parent=35 // pred_check
          %p1313 = pneg %p92
        $region38: #{tpu_custom_call.1} parent=35 // pred_check_branch
          %1315 = sbr.rel (%p1313) target = $region40
        $region39: #{tpu_custom_call.1} parent=35 // pred_region
          %s1316 = sand.u32 %s77, 1
          %s1317 = scalar_lea.sflag [#allocation3], %s1316
          %s1318 = sand.u32 %s77, 1
          %s1319 = smul.addr %s1318, 64
          %s1320 = scalar_lea.vmem [#allocation2], %s1319
          %1322 = dma.done %s1317, 1024
        $region40: #{tpu_custom_call.1} parent=35 // pred_fallthru
          _
      $region36: #{tpu_custom_call.1} parent=5 // pred_fallthru
        _
    $region6: #{tpu_custom_call.1} parent=1 // loop_footer
      %s15 = sadd.s32 1, %s11
    $region7: #{tpu_custom_call.1} parent=1 // loop_footer_branch
      %10 = sbr.rel target = $region3
    $region8: #{tpu_custom_call.1} parent=1 // loop_exit
      _
    %1323 = vsyncpa [#allocation3], 1
    %s1324 = scalar_lea.sflag [#allocation3], 1
    %1325 = vsyncpa %s1324, 1

</llo_original>
